<compile_context>
chip_gen: v7x
topology: tpu7x:2x2x1
jax: 0.10.0
libtpu: 0.0.40
codegen_flags: <defaults>
</compile_context>

<pallas_src>
import functools

import jax
import jax.numpy as jnp
from jax.experimental import pallas as pl
from jax.experimental.pallas import tpu as pltpu


# ---------------------------------------------------------------------------
# Pallas kernels
# ---------------------------------------------------------------------------
def _mm_bias_kernel(a_ref, b_ref, c_ref, o_ref, *, relu):
    """out = [relu](a @ b + bias).  BN scale is pre-folded into b (glue)."""
    acc = jnp.dot(a_ref[...], b_ref[...], preferred_element_type=jnp.float32)
    out = acc + c_ref[...]
    if relu:
        out = jnp.maximum(out, 0.0)
    o_ref[...] = out.astype(o_ref.dtype)


def _mm_bias_res_kernel(a_ref, b_ref, c_ref, r_ref, o_ref, *, relu):
    """out = [relu](a @ b + bias + residual) -- BasicBlock tail (identity res)."""
    acc = jnp.dot(a_ref[...], b_ref[...], preferred_element_type=jnp.float32)
    out = acc + c_ref[...] + r_ref[...].astype(jnp.float32)
    if relu:
        out = jnp.maximum(out, 0.0)
    o_ref[...] = out.astype(o_ref.dtype)


def _mm_dual_bias_kernel(a_ref, b_ref, ad_ref, bd_ref, c_ref, o_ref, *, relu):
    """out = [relu](a @ b + ad @ bd + bias) -- conv2 + fused 1x1 downsample."""
    acc = jnp.dot(a_ref[...], b_ref[...], preferred_element_type=jnp.float32)
    acc = acc + jnp.dot(ad_ref[...], bd_ref[...],
                        preferred_element_type=jnp.float32)
    out = acc + c_ref[...]
    if relu:
        out = jnp.maximum(out, 0.0)
    o_ref[...] = out.astype(o_ref.dtype)


def _maxpool_kernel(p_ref, o_ref):
    """p_ref: (9, TM, C) tap-major window patches -> o_ref: (TM, C) max."""
    o_ref[...] = jnp.max(p_ref[...], axis=0)


def _fc_logsoftmax_kernel(x_ref, w_ref, b_ref, o_ref):
    """logits = x @ w + b ; out = log_softmax(logits, axis=1) (f32 epilogue)."""
    logits = jnp.dot(x_ref[...], w_ref[...], preferred_element_type=jnp.float32)
    logits = logits + b_ref[...]
    m = jnp.max(logits, axis=1, keepdims=True)
    s = logits - m
    lse = jnp.log(jnp.sum(jnp.exp(s), axis=1, keepdims=True))
    o_ref[...] = (s - lse).astype(o_ref.dtype)


# ---------------------------------------------------------------------------
# Pallas wrappers
# ---------------------------------------------------------------------------
def _round_up(x, m):
    return ((x + m - 1) // m) * m


def _mm_tiles(M, N):
    """Pick (TM, M_pad, TN) with (8,128)-friendly tiles; tile N when possible."""
    M8 = _round_up(max(M, 8), 8)
    TM = min(256, M8)
    M_pad = _round_up(M8, TM)
    TN = 128 if N % 128 == 0 else N
    return TM, M_pad, TN


def matmul_bias(a, b, bias, residual=None, relu=True):
    """a:(M,K)bf16 @ b:(K,N)bf16 + bias(f32) [+residual(f32)] [+relu] -> f32."""
    M, K = a.shape
    _, N = b.shape
    TM, M_pad, TN = _mm_tiles(M, N)

    a_p = jnp.pad(a, ((0, M_pad - M), (0, 0))) if M_pad != M else a

    in_specs = [
        pl.BlockSpec((TM, K), lambda i, j: (i, 0)),
        pl.BlockSpec((K, TN), lambda i, j: (0, j)),
        pl.BlockSpec((1, TN), lambda i, j: (0, j)),
    ]
    args = [a_p, b, bias]
    if residual is not None:
        r_p = (jnp.pad(residual, ((0, M_pad - M), (0, 0)))
               if M_pad != M else residual)
        in_specs.append(pl.BlockSpec((TM, TN), lambda i, j: (i, j)))
        args.append(r_p)
        kernel = functools.partial(_mm_bias_res_kernel, relu=relu)
    else:
        kernel = functools.partial(_mm_bias_kernel, relu=relu)

    out = pl.pallas_call(
        kernel,
        grid=(M_pad // TM, N // TN),
        in_specs=in_specs,
        out_specs=pl.BlockSpec((TM, TN), lambda i, j: (i, j)),
        out_shape=jax.ShapeDtypeStruct((M_pad, N), jnp.float32),
        compiler_params=pltpu.CompilerParams(
            dimension_semantics=("parallel", "parallel")),
    )(*args)
    return out[:M]


def matmul_dual_bias(a, b, ad, bd, bias, relu=True):
    """relu(a @ b + ad @ bd + bias): conv2 with the 1x1 downsample fused in."""
    M, K = a.shape
    _, N = b.shape
    _, KD = ad.shape
    TM, M_pad, TN = _mm_tiles(M, N)
    if M_pad != M:
        a = jnp.pad(a, ((0, M_pad - M), (0, 0)))
        ad = jnp.pad(ad, ((0, M_pad - M), (0, 0)))

    out = pl.pallas_call(
        functools.partial(_mm_dual_bias_kernel, relu=relu),
        grid=(M_pad // TM, N // TN),
        in_specs=[
            pl.BlockSpec((TM, K), lambda i, j: (i, 0)),
            pl.BlockSpec((K, TN), lambda i, j: (0, j)),
            pl.BlockSpec((TM, KD), lambda i, j: (i, 0)),
            pl.BlockSpec((KD, TN), lambda i, j: (0, j)),
            pl.BlockSpec((1, TN), lambda i, j: (0, j)),
        ],
        out_specs=pl.BlockSpec((TM, TN), lambda i, j: (i, j)),
        out_shape=jax.ShapeDtypeStruct((M_pad, N), jnp.float32),
        compiler_params=pltpu.CompilerParams(
            dimension_semantics=("parallel", "parallel")),
    )(a, b, ad, bd, bias)
    return out[:M]


def _im2col(x, kh, kw, stride, pad):
    """x:(N,H,W,C) f32 NHWC -> patches:(N*OH*OW, kh*kw*C) bf16 (MXU operand)."""
    N, H, W, C = x.shape
    OH = (H + 2 * pad - kh) // stride + 1
    OW = (W + 2 * pad - kw) // stride + 1
    xp = jnp.pad(x.astype(jnp.bfloat16),
                 ((0, 0), (pad, pad), (pad, pad), (0, 0)))
    cols = []
    for dy in range(kh):
        for dx in range(kw):
            cols.append(xp[:, dy:dy + stride * OH:stride,
                           dx:dx + stride * OW:stride, :])
    patches = jnp.stack(cols, axis=3)  # (N, OH, OW, kh*kw, C)
    return patches.reshape(N * OH * OW, kh * kw * C), (N, OH, OW)


def _fold_bn(w, scale):
    """(KH,KW,IC,OC) conv weight * per-OC BN scale -> (K, OC) bf16 operand."""
    kh, kw, ic, oc = w.shape
    return (w.reshape(kh * kw * ic, oc) * scale).astype(jnp.bfloat16)


def conv_bn(x, w, scale, bias, stride, pad, relu=True, residual=None):
    """Conv2d(no bias) + folded BatchNorm (+residual) (+ReLU) via Pallas matmul."""
    kh, kw, ic, oc = w.shape
    patches, (N, OH, OW) = _im2col(x, kh, kw, stride, pad)
    wm = _fold_bn(w, scale)
    res2d = residual.reshape(N * OH * OW, oc) if residual is not None else None
    out = matmul_bias(patches, wm, bias, residual=res2d, relu=relu)
    return out.reshape(N, OH, OW, oc)


def maxpool_3x3_s2_p1(x):
    """nn.MaxPool2d(kernel_size=3, stride=2, padding=1) on NHWC input."""
    N, H, W, C = x.shape
    OH = (H + 2 - 3) // 2 + 1
    OW = (W + 2 - 3) // 2 + 1
    neg = jnp.finfo(x.dtype).min
    xp = jnp.pad(x, ((0, 0), (1, 1), (1, 1), (0, 0)), constant_values=neg)
    cols = [xp[:, dy:dy + 2 * OH:2, dx:dx + 2 * OW:2, :]
            for dy in range(3) for dx in range(3)]
    # Tap-major layout (9, M, C): each tap is a contiguous (M, C) slab.
    M = N * OH * OW
    patches = jnp.stack(cols, axis=0).reshape(9, M, C)

    M8 = _round_up(max(M, 8), 8)
    TM = min(512, M8)
    M_pad = _round_up(M8, TM)
    if M_pad != M:
        patches = jnp.pad(patches, ((0, 0), (0, M_pad - M), (0, 0)),
                          constant_values=neg)

    out = pl.pallas_call(
        _maxpool_kernel,
        grid=(M_pad // TM,),
        in_specs=[pl.BlockSpec((9, TM, C), lambda i: (0, i, 0))],
        out_specs=pl.BlockSpec((TM, C), lambda i: (i, 0)),
        out_shape=jax.ShapeDtypeStruct((M_pad, C), x.dtype),
        compiler_params=pltpu.CompilerParams(
            dimension_semantics=("parallel",)),
    )(patches)
    return out[:M].reshape(N, OH, OW, C)


def fc_logsoftmax(x, w, b):
    """Linear(512 -> num_classes) + LogSoftmax(dim=1), fused in one kernel."""
    M, K = x.shape
    _, N = w.shape
    return pl.pallas_call(
        _fc_logsoftmax_kernel,
        grid=(1,),
        in_specs=[
            pl.BlockSpec((M, K), lambda i: (0, 0)),
            pl.BlockSpec((K, N), lambda i: (0, 0)),
            pl.BlockSpec((1, N), lambda i: (0, 0)),
        ],
        out_specs=pl.BlockSpec((M, N), lambda i: (0, 0)),
        out_shape=jax.ShapeDtypeStruct((M, N), jnp.float32),
    )(x.astype(jnp.bfloat16), w.astype(jnp.bfloat16), b)


# ---------------------------------------------------------------------------
# ResNet-18 definition (parameters + forward)
# ---------------------------------------------------------------------------
def init_params(key, num_classes=10):
    keys = iter(jax.random.split(key, 200))

    def conv_w(kh, kw, ic, oc):
        std = (2.0 / (kh * kw * ic)) ** 0.5
        return std * jax.random.normal(next(keys), (kh, kw, ic, oc), jnp.float32)

    def bn(oc):
        gamma = 1.0 + 0.1 * jax.random.normal(next(keys), (1, oc), jnp.float32)
        beta = 0.1 * jax.random.normal(next(keys), (1, oc), jnp.float32)
        mean = 0.1 * jax.random.normal(next(keys), (1, oc), jnp.float32)
        var = jnp.abs(1.0 + 0.1 * jax.random.normal(next(keys), (1, oc),
                                                    jnp.float32))
        scale = gamma / jnp.sqrt(var + 1e-5)
        bias = beta - mean * scale
        return scale, bias

    params = {}
    # conv1 replaced with in_channels=1 (as in the PyTorch module), bias=False
    params["conv1_w"] = conv_w(7, 7, 1, 64)
    params["bn1_s"], params["bn1_b"] = bn(64)

    in_c = 64
    for name, out_c, stride in [("layer1", 64, 1), ("layer2", 128, 2),
                                ("layer3", 256, 2), ("layer4", 512, 2)]:
        blocks = []
        for bi in range(2):
            s = stride if bi == 0 else 1
            cin = in_c if bi == 0 else out_c
            bp = {"stride": s}
            bp["conv1_w"] = conv_w(3, 3, cin, out_c)
            bp["bn1_s"], bp["bn1_b"] = bn(out_c)
            bp["conv2_w"] = conv_w(3, 3, out_c, out_c)
            bp["bn2_s"], bp["bn2_b"] = bn(out_c)
            if s != 1 or cin != out_c:
                bp["down_w"] = conv_w(1, 1, cin, out_c)
                bp["dbn_s"], bp["dbn_b"] = bn(out_c)
            blocks.append(bp)
        params[name] = blocks
        in_c = out_c

    params["fc_w"] = 0.05 * jax.random.normal(next(keys), (512, num_classes),
                                              jnp.float32)
    params["fc_b"] = 0.05 * jax.random.normal(next(keys), (1, num_classes),
                                              jnp.float32)
    return params


def basic_block(x, bp):
    s = bp["stride"]
    out = conv_bn(x, bp["conv1_w"], bp["bn1_s"], bp["bn1_b"],
                  stride=s, pad=1, relu=True)

    # conv2 (+ BN2) with the residual path fused into the same pallas_call.
    p2, (N, OH, OW) = _im2col(out, 3, 3, 1, 1)
    w2 = _fold_bn(bp["conv2_w"], bp["bn2_s"])
    oc = w2.shape[1]

    if "down_w" in bp:
        # relu(p2 @ w2 + pd @ wd + (b2 + bd)): 1x1 downsample conv fused in.
        pd, _ = _im2col(x, 1, 1, s, 0)
        wd = _fold_bn(bp["down_w"], bp["dbn_s"])
        bias = bp["bn2_b"] + bp["dbn_b"]
        y = matmul_dual_bias(p2, w2, pd, wd, bias, relu=True)
    else:
        res = x.reshape(N * OH * OW, oc)
        y = matmul_bias(p2, w2, bp["bn2_b"], residual=res, relu=True)
    return y.reshape(N, OH, OW, oc)


def resnet18_forward(x_nchw, params):
    # layout: input NCHW (like PyTorch) -> NHWC internally.
    x = jnp.transpose(x_nchw, (0, 2, 3, 1)).astype(jnp.float32)

    # stem: conv1 7x7/s2/p3 + bn + relu, maxpool 3x3/s2/p1
    x = conv_bn(x, params["conv1_w"], params["bn1_s"], params["bn1_b"],
                stride=2, pad=3, relu=True)
    x = maxpool_3x3_s2_p1(x)

    for name in ("layer1", "layer2", "layer3", "layer4"):
        for bp in params[name]:
            x = basic_block(x, bp)

    # AdaptiveAvgPool2d((1,1)) -- spatial is tiny, mean is glue
    x = jnp.mean(x, axis=(1, 2))  # (N, 512)

    # fc + LogSoftmax(dim=1), fused Pallas kernel
    return fc_logsoftmax(x, params["fc_w"], params["fc_b"])


if __name__ == "__main__":
    key = jax.random.PRNGKey(0)
    pkey, xkey = jax.random.split(key)
    params = init_params(pkey, num_classes=10)

    # Small input consistent with conv1(in_channels=1): (N=2, C=1, H=32, W=32)
    x = jax.random.normal(xkey, (2, 1, 32, 32), jnp.float32)

    out = resnet18_forward(x, params)
    out = jax.block_until_ready(out)

    assert out.shape == (2, 10), out.shape
    # log-softmax rows must exponentiate-sum to 1
    assert jnp.allclose(jnp.exp(out).sum(axis=1), 1.0, atol=1e-4)
    print("KERNEL_OK")
</pallas_src>

<mosaic_0001>
module attributes {stable_mosaic.version = 11 : i64} {
  func.func @_mm_bias_kernel(%arg0: i32, %arg1: i32, %arg2: memref<256x49xbf16, #tpu.memory_space<vmem>>, %arg3: memref<49x64xbf16, #tpu.memory_space<vmem>>, %arg4: memref<1x64xf32, #tpu.memory_space<vmem>>, %arg5: memref<256x64xf32, #tpu.memory_space<vmem>>) attributes {dimension_semantics = [#tpu.dimension_semantics<parallel>, #tpu.dimension_semantics<parallel>], iteration_bounds = array<i64: 2, 1>, scalar_prefetch = 0 : i64, scratch_operands = 0 : i64, tpu.core_type = #tpu.core_type<tc>, window_params = [{transform_indices = @transform_0, window_bounds = array<i64: 256, 49>}, {transform_indices = @transform_1, window_bounds = array<i64: 49, 64>}, {transform_indices = @transform_2, window_bounds = array<i64: 1, 64>}, {transform_indices = @transform_3, window_bounds = array<i64: 256, 64>}]} {
    %c0 = arith.constant 0 : index
    %c0_0 = arith.constant 0 : index
    %0 = vector.load %arg2[%c0, %c0_0] : memref<256x49xbf16, #tpu.memory_space<vmem>>, vector<256x49xbf16>
    %c0_1 = arith.constant 0 : index
    %c0_2 = arith.constant 0 : index
    %1 = vector.load %arg3[%c0_1, %c0_2] : memref<49x64xbf16, #tpu.memory_space<vmem>>, vector<49x64xbf16>
    %cst = arith.constant dense<0.000000e+00> : vector<256x64xf32>
    %2 = tpu.matmul %0, %1, %cst {dimension_numbers = #tpu.dot_dimension_numbers<[1], [0], [0], [1], [0, 0, 1, 1], [], []>} : vector<256x49xbf16>, vector<49x64xbf16>, vector<256x64xf32> -> vector<256x64xf32>
    %c0_3 = arith.constant 0 : index
    %c0_4 = arith.constant 0 : index
    %3 = vector.load %arg4[%c0_3, %c0_4] : memref<1x64xf32, #tpu.memory_space<vmem>>, vector<1x64xf32>
    %4 = vector.broadcast %3 : vector<1x64xf32> to vector<256x64xf32>
    %5 = arith.addf %2, %4 : vector<256x64xf32>
    %cst_5 = arith.constant 0.000000e+00 : f32
    %6 = vector.broadcast %cst_5 : f32 to vector<256x64xf32>
    %7 = arith.maximumf %5, %6 : vector<256x64xf32>
    %c0_6 = arith.constant 0 : index
    %c0_7 = arith.constant 0 : index
    %8 = vector.load %arg5[%c0_6, %c0_7] : memref<256x64xf32, #tpu.memory_space<vmem>>, vector<256x64xf32>
    tpu.vector_store %arg5[%c0_6, %c0_7], %7 {strides = array<i32>} : memref<256x64xf32, #tpu.memory_space<vmem>>, vector<256x64xf32>,
    return
  }
  func.func @transform_0(%arg0: i32, %arg1: i32) -> (i32, i32) {
    %c0_i32 = arith.constant 0 : i32
    %c0_i32_0 = arith.constant 0 : i32
    return %arg0, %c0_i32 : i32, i32
  }
  func.func @transform_1(%arg0: i32, %arg1: i32) -> (i32, i32) {
    %c0_i32 = arith.constant 0 : i32
    %c0_i32_0 = arith.constant 0 : i32
    return %c0_i32, %arg1 : i32, i32
  }
  func.func @transform_2(%arg0: i32, %arg1: i32) -> (i32, i32) {
    %c0_i32 = arith.constant 0 : i32
    %c0_i32_0 = arith.constant 0 : i32
    return %c0_i32, %arg1 : i32, i32
  }
  func.func @transform_3(%arg0: i32, %arg1: i32) -> (i32, i32) {
    %c0_i32 = arith.constant 0 : i32
    return %arg0, %arg1 : i32, i32
  }
}

</mosaic_0001>

<llo_original>
// kernel: tpu_custom_call.1
$region0: #{tpu_custom_call.1}
  #allocation0 [shape = 'u32[]', space=smem, size = 0x4, offset = 0x4, fixed_abs, tag = 'smem constant byte address 0x4 - core index']
  #allocation1 [shape = 'u32[144,128]{1,0:T(1,128)}', space=vmem, size = 0x12000, scoped, tag = 'internal scratch']
  %s0 = inlined_call_operand.vmem [shape: bf16[512,49], index: 0, kind: input, shape index: {}]
  %s1 = inlined_call_operand.vmem [shape: bf16[49,64], index: 1, kind: input, shape index: {}]
  %s2 = inlined_call_operand.vmem [shape: f32[1,64], index: 2, kind: input, shape index: {}]
  %s3 = inlined_call_operand.vmem [shape: f32[512,64], index: 3, kind: output, shape index: {}]
  %s4 = sld [smem:[#allocation0]]
  $region45: #{tpu_custom_call.1} parent=0
    _
  %s6 = ssub.s32 1, %s4
  %s7 = scalar_select 0, %s6, %s4
  loop: start=0, step=1, limit=4
  $region2: #{tpu_custom_call.1} parent=0 // loop_pre_header
    _
  $region3: #{tpu_custom_call.1} parent=0 // loop_header
    %s9 = sphi 0, %s13
    %p10 = scmp.ge.s32.totalorder %s9, 4
    %s16 = sphi 0, %s28
    %s17 = sphi 0, %s24
    %s18 = sphi 0, %s16
    %s19 = sphi 0, %s17
    %s20 = sphi 0, %s18
    %s21 = sphi 0, %s19
    %s31 = sphi 0, %s33
    %s34 = sphi 0, %s31
    %s35 = sphi 0, %s34
    %s51 = sphi 0, %s35
    %s57 = sphi 0, %s59
    %s60 = sphi 0, %s57
    %s61 = sphi 0, %s60
    %s77 = sphi 0, %s61
    %s83 = sphi 0, %s85
    %s86 = sphi 0, %s83
    %s87 = sphi 0, %s86
    %s103 = sphi 0, %s87
    %s111 = sphi 0, %s113
    %s114 = sphi 0, %s111
    %s115 = sphi 0, %s114
    %s131 = sphi 0, %s115
  $region4: #{tpu_custom_call.1} parent=0 // loop_header_branch
    %12 = sbr.rel (%p10) target = $region8
  $region5: #{tpu_custom_call.1} parent=0 // loop_body
    %s14 = ssub.s32 %s9, 1
    %s15 = ssub.s32 %s9, 2
    %s22 = sadd.s32 1, %s17
    %p23 = scmp.ge.s32.totalorder %s22, 1
    %s24 = scalar_select %p23, 0, %s22
    %s25 = sadd.s32 1, %s16
    %s26 = scalar_select %p23, %s25, %s16
    %p27 = scmp.ge.s32.totalorder %s26, 2
    %s28 = scalar_select %p27, 0, %s26
    %s29 = ssub.s32 %s16, %s28
    %p30 = scmp.eq.s32.totalorder %s29, 0
    %s32 = sadd.s32 %s31, 1
    %s33 = scalar_select %p30, %s31, %s32
    %p36 = pneg %p30
    %p37 = scmp.eq.s32.totalorder %s9, 1
    %p38 = por %p36, %p37
    %p39 = scmp.ne.s32.totalorder %s31, %s34
    %p40 = scmp.eq.s32.totalorder %s9, 0
    %p41 = por %p39, %p40
    %p42 = scmp.ne.s32.totalorder %s31, %s34
    %p43 = scmp.eq.s32.totalorder %s14, 1
    %p44 = por %p42, %p43
    %p45 = scmp.ne.s32.totalorder %s34, %s35
    %p46 = scmp.eq.s32.totalorder %s14, 0
    %p47 = por %p45, %p46
    %p48 = scmp.ne.s32.totalorder %s34, %s35
    %p49 = scmp.eq.s32.totalorder %s15, 1
    %p50 = por %p48, %p49
    %p52 = scmp.ne.s32.totalorder %s35, %s51
    %p53 = scmp.eq.s32.totalorder %s15, 0
    %p54 = por %p52, %p53
    %s55 = ssub.s32 %s17, %s24
    %p56 = scmp.eq.s32.totalorder %s55, 0
    %s58 = sadd.s32 %s57, 1
    %s59 = scalar_select %p56, %s57, %s58
    %p62 = pneg %p56
    %p63 = scmp.eq.s32.totalorder %s9, 1
    %p64 = por %p62, %p63
    %p65 = scmp.ne.s32.totalorder %s57, %s60
    %p66 = scmp.eq.s32.totalorder %s9, 0
    %p67 = por %p65, %p66
    %p68 = scmp.ne.s32.totalorder %s57, %s60
    %p69 = scmp.eq.s32.totalorder %s14, 1
    %p70 = por %p68, %p69
    %p71 = scmp.ne.s32.totalorder %s60, %s61
    %p72 = scmp.eq.s32.totalorder %s14, 0
    %p73 = por %p71, %p72
    %p74 = scmp.ne.s32.totalorder %s60, %s61
    %p75 = scmp.eq.s32.totalorder %s15, 1
    %p76 = por %p74, %p75
    %p78 = scmp.ne.s32.totalorder %s61, %s77
    %p79 = scmp.eq.s32.totalorder %s15, 0
    %p80 = por %p78, %p79
    %s81 = ssub.s32 %s17, %s24
    %p82 = scmp.eq.s32.totalorder %s81, 0
    %s84 = sadd.s32 %s83, 1
    %s85 = scalar_select %p82, %s83, %s84
    %p88 = pneg %p82
    %p89 = scmp.eq.s32.totalorder %s9, 1
    %p90 = por %p88, %p89
    %p91 = scmp.ne.s32.totalorder %s83, %s86
    %p92 = scmp.eq.s32.totalorder %s9, 0
    %p93 = por %p91, %p92
    %p94 = scmp.ne.s32.totalorder %s83, %s86
    %p95 = scmp.eq.s32.totalorder %s14, 1
    %p96 = por %p94, %p95
    %p97 = scmp.ne.s32.totalorder %s86, %s87
    %p98 = scmp.eq.s32.totalorder %s14, 0
    %p99 = por %p97, %p98
    %p100 = scmp.ne.s32.totalorder %s86, %s87
    %p101 = scmp.eq.s32.totalorder %s15, 1
    %p102 = por %p100, %p101
    %p104 = scmp.ne.s32.totalorder %s87, %s103
    %p105 = scmp.eq.s32.totalorder %s15, 0
    %p106 = por %p104, %p105
    %s107 = ssub.s32 %s16, %s28
    %s108 = ssub.s32 %s17, %s24
    %s109 = sor.u32 %s107, %s108
    %p110 = scmp.eq.s32.totalorder %s109, 0
    %s112 = sadd.s32 %s111, 1
    %s113 = scalar_select %p110, %s111, %s112
    %p116 = pneg %p110
    %p117 = scmp.eq.s32.totalorder %s9, 1
    %p118 = por %p116, %p117
    %p119 = scmp.ne.s32.totalorder %s111, %s114
    %p120 = scmp.eq.s32.totalorder %s9, 0
    %p121 = por %p119, %p120
    %p122 = scmp.ne.s32.totalorder %s111, %s114
    %p123 = scmp.eq.s32.totalorder %s14, 1
    %p124 = por %p122, %p123
    %p125 = scmp.ne.s32.totalorder %s114, %s115
    %p126 = scmp.eq.s32.totalorder %s14, 0
    %p127 = por %p125, %p126
    %p128 = scmp.ne.s32.totalorder %s114, %s115
    %p129 = scmp.eq.s32.totalorder %s15, 1
    %p130 = por %p128, %p129
    %p132 = scmp.ne.s32.totalorder %s115, %s131
    %p133 = scmp.eq.s32.totalorder %s15, 0
    %p134 = por %p132, %p133
    %p135 = scmp.le.s32.totalorder 1, %s9
    %p136 = scmp.lt.s32.totalorder %s9, 3
    %p137 = pnand %p135, %p136
    %p138 = pneg %p137
    // Predicated region
    $region9: #{tpu_custom_call.1} parent=5 // pred_check
      _
    $region10: #{tpu_custom_call.1} parent=5 // pred_check_branch
      %140 = sbr.rel (%p137) target = $region12
    $region11: #{tpu_custom_call.1} parent=5 // pred_region
      %s141 = ssub.s32 %s9, 1
      // Predicated region
      $region13: #{tpu_custom_call.1} parent=11 // pred_check
        %p142 = pneg %p73
      $region14: #{tpu_custom_call.1} parent=11 // pred_check_branch
        %144 = sbr.rel (%p142) target = $region16
      $region15: #{tpu_custom_call.1} parent=11 // pred_region
        %p145 = scmp.lt.s32.totalorder %s19, 0
        %s146 = scalar_select %p145, %s19, 0
        %s147 = smul.addr %s146, 4
        %s148 = scalar_lea.vmem %s1, %s147
      $region16: #{tpu_custom_call.1} parent=11 // pred_fallthru
        _
      // Predicated region
      $region17: #{tpu_custom_call.1} parent=11 // pred_check
        %p149 = pneg %p99
      $region18: #{tpu_custom_call.1} parent=11 // pred_check_branch
        %151 = sbr.rel (%p149) target = $region20
      $region19: #{tpu_custom_call.1} parent=11 // pred_region
        %p152 = scmp.lt.s32.totalorder %s19, 0
        %s153 = scalar_select %p152, %s19, 0
        %s154 = scalar_lea.vmem %s2, %s153
      $region20: #{tpu_custom_call.1} parent=11 // pred_fallthru
        _
    $region12: #{tpu_custom_call.1} parent=5 // pred_fallthru
      _
    %p155 = scmp.lt.s32.totalorder %s9, 2
    // Predicated region
    $region21: #{tpu_custom_call.1} parent=5 // pred_check
      %p156 = pneg %p155
    $region22: #{tpu_custom_call.1} parent=5 // pred_check_branch
      %158 = sbr.rel (%p156) target = $region24
    $region23: #{tpu_custom_call.1} parent=5 // pred_region
      // Predicated region
      $region25: #{tpu_custom_call.1} parent=23 // pred_check
        %p159 = pneg %p41
      $region26: #{tpu_custom_call.1} parent=23 // pred_check_branch
        %161 = sbr.rel (%p159) target = $region28
      $region27: #{tpu_custom_call.1} parent=23 // pred_region
        %s162 = smul.u32 32, %s16
        %p163 = scmp.lt.s32.totalorder %s162, 63
        %s164 = scalar_select %p163, %s162, 63
        %s165 = smul.addr %s164, 4
        %s166 = scalar_lea.vmem %s0, %s165
        %s167 = smul.u32 32, %s16
      $region28: #{tpu_custom_call.1} parent=23 // pred_fallthru
        _
    $region24: #{tpu_custom_call.1} parent=5 // pred_fallthru
      _
    %p168 = scmp.le.s32.totalorder 1, %s9
    %p169 = scmp.lt.s32.totalorder %s9, 3
    %p170 = pnand %p168, %p169
    %p171 = pneg %p170
    // Predicated region
    $region29: #{tpu_custom_call.1} parent=5 // pred_check
      _
    $region30: #{tpu_custom_call.1} parent=5 // pred_check_branch
      %173 = sbr.rel (%p170) target = $region32
    $region31: #{tpu_custom_call.1} parent=5 // pred_region
      %s174 = ssub.s32 %s9, 1
      %s175 = smul.u32 32, %s18
      %p176 = scmp.lt.s32.totalorder %s175, 63
      %s177 = scalar_select %p176, %s175, 63
      %s178 = smul.addr %s177, 4
      %s179 = scalar_lea.vmem %s0, %s178
      %p180 = pneg %p47
      %p181 = pneg %p44
      %p182 = scmp.lt.s32.totalorder %s19, 0
      %s183 = scalar_select %p182, %s19, 0
      %s184 = smul.addr %s183, 4
      %s185 = scalar_lea.vmem %s1, %s184
      %p186 = pneg %p73
      %p187 = pneg %p70
      %p188 = scmp.lt.s32.totalorder %s19, 0
      %s189 = scalar_select %p188, %s19, 0
      %s190 = scalar_lea.vmem %s2, %s189
      %p191 = pneg %p99
      %p192 = pneg %p96
      %p193 = pneg %p127
      %p194 = pneg %p124
      %s195 = smul.u32 32, %s18
      %p196 = scmp.lt.s32.totalorder %s195, 63
      %s197 = scalar_select %p196, %s195, 63
      %p198 = scmp.lt.s32.totalorder %s19, 0
      %s199 = scalar_select %p198, %s19, 0
      %s200 = sadd.s32 %s199, %s197
      %s201 = smul.addr %s200, 8
      %s202 = scalar_lea.vmem %s3, %s201
      %s203 = smul.u32 32, %s18
      %p204 = scmp.lt.s32.totalorder %s203, 63
      %s205 = scalar_select %p204, %s203, 63
      %s206 = smul.addr %s205, 4
      %s207 = scalar_lea.vmem %s0, %s206
      %s208 = smul.u32 32, %s18
      %p209 = scmp.lt.s32.totalorder %s19, 0
      %s210 = scalar_select %p209, %s19, 0
      %s211 = smul.addr %s210, 4
      %s212 = scalar_lea.vmem %s1, %s211
      %p213 = scmp.lt.s32.totalorder %s19, 0
      %s214 = scalar_select %p213, %s19, 0
      %s215 = scalar_lea.vmem %s2, %s214
      %s216 = smul.u32 32, %s18
      %p217 = scmp.lt.s32.totalorder %s216, 63
      %s218 = scalar_select %p217, %s216, 63
      %p219 = scmp.lt.s32.totalorder %s19, 0
      %s220 = scalar_select %p219, %s19, 0
      %s221 = sadd.s32 %s220, %s218
      %s222 = smul.addr %s221, 8
      %s223 = scalar_lea.vmem %s3, %s222
      %s224 = smul.u32 32, %s18
      %v226 = vld [vmem:[%s207] sm:$0xf]
      %v227 = vld [vmem:[%s207 + $0x4] sm:$0xf]
      %v228 = vld [vmem:[%s207 + $0x8] sm:$0xf]
      %v229 = vld [vmem:[%s207 + $0xc] sm:$0xf]
      %v230 = vld [vmem:[%s207 + $0x10] sm:$0xf]
      %v231 = vld [vmem:[%s207 + $0x14] sm:$0xf]
      %v232 = vld [vmem:[%s207 + $0x18] sm:$0xf]
      %v233 = vld [vmem:[%s207 + $0x1c] sm:$0xf]
      %v234 = vld [vmem:[%s207 + $0x20] sm:$0xf]
      %v235 = vld [vmem:[%s207 + $0x24] sm:$0xf]
      %v236 = vld [vmem:[%s207 + $0x28] sm:$0xf]
      %v237 = vld [vmem:[%s207 + $0x2c] sm:$0xf]
      %v238 = vld [vmem:[%s207 + $0x30] sm:$0xf]
      %v239 = vld [vmem:[%s207 + $0x34] sm:$0xf]
      %v240 = vld [vmem:[%s207 + $0x38] sm:$0xf]
      %v241 = vld [vmem:[%s207 + $0x3c] sm:$0xf]
      %v242 = vld [vmem:[%s207 + $0x40] sm:$0xf]
      %v243 = vld [vmem:[%s207 + $0x44] sm:$0xf]
      %v244 = vld [vmem:[%s207 + $0x48] sm:$0xf]
      %v245 = vld [vmem:[%s207 + $0x4c] sm:$0xf]
      %v246 = vld [vmem:[%s207 + $0x50] sm:$0xf]
      %v247 = vld [vmem:[%s207 + $0x54] sm:$0xf]
      %v248 = vld [vmem:[%s207 + $0x58] sm:$0xf]
      %v249 = vld [vmem:[%s207 + $0x5c] sm:$0xf]
      %v250 = vld [vmem:[%s207 + $0x60] sm:$0xf]
      %v251 = vld [vmem:[%s207 + $0x64] sm:$0xf]
      %v252 = vld [vmem:[%s207 + $0x68] sm:$0xf]
      %v253 = vld [vmem:[%s207 + $0x6c] sm:$0xf]
      %v254 = vld [vmem:[%s207 + $0x70] sm:$0xf]
      %v255 = vld [vmem:[%s207 + $0x74] sm:$0xf]
      %v256 = vld [vmem:[%s207 + $0x78] sm:$0xf]
      %v257 = vld [vmem:[%s207 + $0x7c] sm:$0xf]
      %v258 = vld [vmem:[%s212] sm:$0xf]
      %v259 = vld [vmem:[%s212 + $0x4] sm:$0xf]
      %v260 = vld [vmem:[%s212 + $0x8] sm:$0xf]
      %v261 = vld [vmem:[%s212 + $0xc] sm:$0xf]
      %v262 = vld [vmem:[%s212 + $0x10] sm:$0xf]
      %v263 = vld [vmem:[%s212 + $0x14] sm:$0xf]
      %v264 = vld [vmem:[%s212 + $0x18] sm:$0x1]
      %v265 = vld [vmem:[%s215] sm:$0x1]
      %v267 = vlaneseq
      %v268 = vshrl.u32 %v267, 7
      %v269 = vsub.s32 0, %v268
      %v270 = vrot.slane %v265, %v269
      %v304 = vunpack.c.l.b16 %v226
      %v305 = vunpack.c.l.b16 %v227
      %v306 = vunpack.c.l.b16 %v228
      %v307 = vunpack.c.l.b16 %v229
      %v308 = vunpack.c.l.b16 %v230
      %v309 = vunpack.c.l.b16 %v231
      %v310 = vunpack.c.l.b16 %v232
      %v311 = vunpack.c.l.b16 %v233
      %v312 = vunpack.c.l.b16 %v234
      %v313 = vunpack.c.l.b16 %v235
      %v314 = vunpack.c.l.b16 %v236
      %v315 = vunpack.c.l.b16 %v237
      %v316 = vunpack.c.l.b16 %v238
      %v317 = vunpack.c.l.b16 %v239
      %v318 = vunpack.c.l.b16 %v240
      %v319 = vunpack.c.l.b16 %v241
      %v320 = vunpack.c.l.b16 %v242
      %v321 = vunpack.c.l.b16 %v243
      %v322 = vunpack.c.l.b16 %v244
      %v323 = vunpack.c.l.b16 %v245
      %v324 = vunpack.c.l.b16 %v246
      %v325 = vunpack.c.l.b16 %v247
      %v326 = vunpack.c.l.b16 %v248
      %v327 = vunpack.c.l.b16 %v249
      %v328 = vunpack.c.l.b16 %v250
      %v329 = vunpack.c.l.b16 %v251
      %v330 = vunpack.c.l.b16 %v252
      %v331 = vunpack.c.l.b16 %v253
      %v332 = vunpack.c.l.b16 %v254
      %v333 = vunpack.c.l.b16 %v255
      %v334 = vunpack.c.l.b16 %v256
      %v335 = vunpack.c.l.b16 %v257
      %v336 = vpack.c.b16 %v305, %v304
      %v337 = vpack.c.b16 %v307, %v306
      %v338 = vpack.c.b16 %v309, %v308
      %v339 = vpack.c.b16 %v311, %v310
      %v340 = vpack.c.b16 %v313, %v312
      %v341 = vpack.c.b16 %v315, %v314
      %v342 = vpack.c.b16 %v317, %v316
      %v343 = vpack.c.b16 %v319, %v318
      %v344 = vpack.c.b16 %v321, %v320
      %v345 = vpack.c.b16 %v323, %v322
      %v346 = vpack.c.b16 %v325, %v324
      %v347 = vpack.c.b16 %v327, %v326
      %v348 = vpack.c.b16 %v329, %v328
      %v349 = vpack.c.b16 %v331, %v330
      %v350 = vpack.c.b16 %v333, %v332
      %v351 = vpack.c.b16 %v335, %v334
      %v359 = vunpack.c.l.b16 %v258
      %v360 = vunpack.c.l.b16 %v259
      %v361 = vunpack.c.l.b16 %v260
      %v362 = vunpack.c.l.b16 %v261
      %v363 = vunpack.c.l.b16 %v262
      %v364 = vunpack.c.l.b16 %v263
      %v365 = vunpack.c.l.b16 %v264
      %v366 = vpack.c.b16 %v360, %v359
      %v367 = vpack.c.b16 %v362, %v361
      %v368 = vpack.c.b16 %v364, %v363
      %v369 = vpack.c.b16 %v365, %v365
      %vm373 = vcmask 400384
      %v375 = vsel %vm373, %v336, 0
      %v378 = vsel %vm373, %v337, 0
      %v381 = vsel %vm373, %v338, 0
      %v384 = vsel %vm373, %v339, 0
      %v387 = vsel %vm373, %v340, 0
      %v390 = vsel %vm373, %v341, 0
      %v393 = vsel %vm373, %v342, 0
      %v396 = vsel %vm373, %v343, 0
      %v399 = vsel %vm373, %v344, 0
      %v402 = vsel %vm373, %v345, 0
      %v405 = vsel %vm373, %v346, 0
      %v408 = vsel %vm373, %v347, 0
      %v411 = vsel %vm373, %v348, 0
      %v414 = vsel %vm373, %v349, 0
      %v417 = vsel %vm373, %v350, 0
      %v420 = vsel %vm373, %v351, 0
      %vm422 = vcmask 1040384
      %v423 = vsel 0, 4294967295, 65535
      %v424 = vsel %vm422, %v423, 0
      %v426 = vand.u32 %v369, %v424
      %428 = vmatprep.subr.bf16.mxu0 0
      %429 = vmatpush1.bf16.msra.mxu0 %v366
      %430 = vmatprep.subr.bf16.mxu0 0
      %431 = vmatpush1.bf16.msra.mxu0 %v367
      %432 = vmatprep.subr.bf16.mxu0 0
      %433 = vmatpush1.bf16.msra.mxu0 %v368
      %434 = vmatprep.subr.bf16.mxu0 0
      %435 = vmatpush1.bf16.msra.mxu0 %v426
      %436 = vmatprep.subr.bf16.mxu0 0
      %437 = vmatpush1.bf16.msra.mxu0 0
      %438 = vmatprep.subr.bf16.mxu0 0
      %439 = vmatpush1.bf16.msra.mxu0 0
      %440 = vmatprep.subr.bf16.mxu0 0
      %441 = vmatpush1.bf16.msra.mxu0 0
      %442 = vmatprep.subr.bf16.mxu0 0
      %443 = vmatpush1.bf16.msra.mxu0 0
      %444 = vmatprep.subr.bf16.mxu0 0
      %445 = vmatpush1.bf16.msra.mxu0 0
      %446 = vmatprep.subr.bf16.mxu0 0
      %447 = vmatpush1.bf16.msra.mxu0 0
      %448 = vmatprep.subr.bf16.mxu0 0
      %449 = vmatpush1.bf16.msra.mxu0 0
      %450 = vmatprep.subr.bf16.mxu0 0
      %451 = vmatpush1.bf16.msra.mxu0 0
      %452 = vmatprep.subr.bf16.mxu0 0
      %453 = vmatpush1.bf16.msra.mxu0 0
      %454 = vmatprep.subr.bf16.mxu0 0
      %455 = vmatpush1.bf16.msra.mxu0 0
      %456 = vmatprep.subr.bf16.mxu0 0
      %457 = vmatpush1.bf16.msra.mxu0 0
      %458 = vmatprep.subr.bf16.mxu0 0
      %459 = vmatpush1.bf16.msra.mxu0 0
      %460 = vmatprep.mubr.bf16.mxu0 0
      %461 = vmatmul.mubr.bf16.gmra.mrb[0].mxu0 %v375
      %v462 = vpop.f32.mrb[0].mxu0
      %v463 = vadd.f32 %v270, %v462
      %v464 = vpop.f32.mrb[0].mxu0
      %v465 = vpop.f32.mrb[0].mxu0
      %v466 = vadd.f32 %v270, %v465
      %v467 = vpop.f32.mrb[0].mxu0
      %468 = vmatprep.mubr.bf16.mxu0 0
      %469 = vmatmul.mubr.bf16.gmra.mrb[0].mxu0 %v378
      %v470 = vpop.f32.mrb[0].mxu0
      %v471 = vadd.f32 %v270, %v470
      %v472 = vpop.f32.mrb[0].mxu0
      %v473 = vpop.f32.mrb[0].mxu0
      %v474 = vadd.f32 %v270, %v473
      %v475 = vpop.f32.mrb[0].mxu0
      %476 = vmatprep.mubr.bf16.mxu0 0
      %477 = vmatmul.mubr.bf16.gmra.mrb[0].mxu0 %v381
      %v478 = vpop.f32.mrb[0].mxu0
      %v479 = vadd.f32 %v270, %v478
      %v480 = vpop.f32.mrb[0].mxu0
      %v481 = vpop.f32.mrb[0].mxu0
      %v482 = vadd.f32 %v270, %v481
      %v483 = vpop.f32.mrb[0].mxu0
      %484 = vmatprep.mubr.bf16.mxu0 0
      %485 = vmatmul.mubr.bf16.gmra.mrb[0].mxu0 %v384
      %v486 = vpop.f32.mrb[0].mxu0
      %v487 = vadd.f32 %v270, %v486
      %v488 = vpop.f32.mrb[0].mxu0
      %v489 = vpop.f32.mrb[0].mxu0
      %v490 = vadd.f32 %v270, %v489
      %v491 = vpop.f32.mrb[0].mxu0
      %492 = vmatprep.mubr.bf16.mxu0 0
      %493 = vmatmul.mubr.bf16.gmra.mrb[0].mxu0 %v387
      %v494 = vpop.f32.mrb[0].mxu0
      %v495 = vadd.f32 %v270, %v494
      %v496 = vpop.f32.mrb[0].mxu0
      %v497 = vpop.f32.mrb[0].mxu0
      %v498 = vadd.f32 %v270, %v497
      %v499 = vpop.f32.mrb[0].mxu0
      %500 = vmatprep.mubr.bf16.mxu0 0
      %501 = vmatmul.mubr.bf16.gmra.mrb[0].mxu0 %v390
      %v502 = vpop.f32.mrb[0].mxu0
      %v503 = vadd.f32 %v270, %v502
      %v504 = vpop.f32.mrb[0].mxu0
      %v505 = vpop.f32.mrb[0].mxu0
      %v506 = vadd.f32 %v270, %v505
      %v507 = vpop.f32.mrb[0].mxu0
      %508 = vmatprep.mubr.bf16.mxu0 0
      %509 = vmatmul.mubr.bf16.gmra.mrb[0].mxu0 %v393
      %v510 = vpop.f32.mrb[0].mxu0
      %v511 = vadd.f32 %v270, %v510
      %v512 = vpop.f32.mrb[0].mxu0
      %v513 = vpop.f32.mrb[0].mxu0
      %v514 = vadd.f32 %v270, %v513
      %v515 = vpop.f32.mrb[0].mxu0
      %516 = vmatprep.mubr.bf16.mxu0 0
      %517 = vmatmul.mubr.bf16.gmra.mrb[0].mxu0 %v396
      %v518 = vpop.f32.mrb[0].mxu0
      %v519 = vadd.f32 %v270, %v518
      %v520 = vpop.f32.mrb[0].mxu0
      %v521 = vpop.f32.mrb[0].mxu0
      %v522 = vadd.f32 %v270, %v521
      %v523 = vpop.f32.mrb[0].mxu0
      %524 = vmatprep.mubr.bf16.mxu0 0
      %525 = vmatmul.mubr.bf16.gmra.mrb[0].mxu0 %v399
      %v526 = vpop.f32.mrb[0].mxu0
      %v527 = vadd.f32 %v270, %v526
      %v528 = vpop.f32.mrb[0].mxu0
      %v529 = vpop.f32.mrb[0].mxu0
      %v530 = vadd.f32 %v270, %v529
      %v531 = vpop.f32.mrb[0].mxu0
      %532 = vmatprep.mubr.bf16.mxu0 0
      %533 = vmatmul.mubr.bf16.gmra.mrb[0].mxu0 %v402
      %v534 = vpop.f32.mrb[0].mxu0
      %v535 = vadd.f32 %v270, %v534
      %v536 = vpop.f32.mrb[0].mxu0
      %v537 = vpop.f32.mrb[0].mxu0
      %v538 = vadd.f32 %v270, %v537
      %v539 = vpop.f32.mrb[0].mxu0
      %540 = vmatprep.mubr.bf16.mxu0 0
      %541 = vmatmul.mubr.bf16.gmra.mrb[0].mxu0 %v405
      %v542 = vpop.f32.mrb[0].mxu0
      %v543 = vadd.f32 %v270, %v542
      %v544 = vpop.f32.mrb[0].mxu0
      %v545 = vpop.f32.mrb[0].mxu0
      %v546 = vadd.f32 %v270, %v545
      %v547 = vpop.f32.mrb[0].mxu0
      %548 = vmatprep.mubr.bf16.mxu0 0
      %549 = vmatmul.mubr.bf16.gmra.mrb[0].mxu0 %v408
      %v550 = vpop.f32.mrb[0].mxu0
      %v551 = vadd.f32 %v270, %v550
      %v552 = vpop.f32.mrb[0].mxu0
      %v553 = vpop.f32.mrb[0].mxu0
      %v554 = vadd.f32 %v270, %v553
      %v555 = vpop.f32.mrb[0].mxu0
      %556 = vmatprep.mubr.bf16.mxu0 0
      %557 = vmatmul.mubr.bf16.gmra.mrb[0].mxu0 %v411
      %v558 = vpop.f32.mrb[0].mxu0
      %v559 = vadd.f32 %v270, %v558
      %v560 = vpop.f32.mrb[0].mxu0
      %v561 = vpop.f32.mrb[0].mxu0
      %v562 = vadd.f32 %v270, %v561
      %v563 = vpop.f32.mrb[0].mxu0
      %564 = vmatprep.mubr.bf16.mxu0 0
      %565 = vmatmul.mubr.bf16.gmra.mrb[0].mxu0 %v414
      %v566 = vpop.f32.mrb[0].mxu0
      %v567 = vadd.f32 %v270, %v566
      %v568 = vpop.f32.mrb[0].mxu0
      %v569 = vpop.f32.mrb[0].mxu0
      %v570 = vadd.f32 %v270, %v569
      %v571 = vpop.f32.mrb[0].mxu0
      %572 = vmatprep.mubr.bf16.mxu0 0
      %573 = vmatmul.mubr.bf16.gmra.mrb[0].mxu0 %v417
      %v574 = vpop.f32.mrb[0].mxu0
      %v575 = vadd.f32 %v270, %v574
      %v576 = vpop.f32.mrb[0].mxu0
      %v577 = vpop.f32.mrb[0].mxu0
      %v578 = vadd.f32 %v270, %v577
      %v579 = vpop.f32.mrb[0].mxu0
      %580 = vmatprep.mubr.bf16.mxu0 0
      %581 = vmatmul.mubr.bf16.gmra.mrb[0].mxu0 %v420
      %v582 = vpop.f32.mrb[0].mxu0
      %v583 = vadd.f32 %v270, %v582
      %v584 = vpop.f32.mrb[0].mxu0
      %v585 = vpop.f32.mrb[0].mxu0
      %v586 = vadd.f32 %v270, %v585
      %v587 = vpop.f32.mrb[0].mxu0
      %588 = vdwg.mxu0
      %v589 = vmax.f32 %v463, 0.0
      %v590 = vmax.f32 %v466, 0.0
      %v591 = vmax.f32 %v471, 0.0
      %v592 = vmax.f32 %v474, 0.0
      %v593 = vmax.f32 %v479, 0.0
      %v594 = vmax.f32 %v482, 0.0
      %v595 = vmax.f32 %v487, 0.0
      %v596 = vmax.f32 %v490, 0.0
      %v597 = vmax.f32 %v495, 0.0
      %v598 = vmax.f32 %v498, 0.0
      %v599 = vmax.f32 %v503, 0.0
      %v600 = vmax.f32 %v506, 0.0
      %v601 = vmax.f32 %v511, 0.0
      %v602 = vmax.f32 %v514, 0.0
      %v603 = vmax.f32 %v519, 0.0
      %v604 = vmax.f32 %v522, 0.0
      %v605 = vmax.f32 %v527, 0.0
      %v606 = vmax.f32 %v530, 0.0
      %v607 = vmax.f32 %v535, 0.0
      %v608 = vmax.f32 %v538, 0.0
      %v609 = vmax.f32 %v543, 0.0
      %v610 = vmax.f32 %v546, 0.0
      %v611 = vmax.f32 %v551, 0.0
      %v612 = vmax.f32 %v554, 0.0
      %v613 = vmax.f32 %v559, 0.0
      %v614 = vmax.f32 %v562, 0.0
      %v615 = vmax.f32 %v567, 0.0
      %v616 = vmax.f32 %v570, 0.0
      %v617 = vmax.f32 %v575, 0.0
      %v618 = vmax.f32 %v578, 0.0
      %v619 = vmax.f32 %v583, 0.0
      %v620 = vmax.f32 %v586, 0.0
      %vm621 = vcmask 523264
      %622 = vst.msk [vmem:[%s223] sm:$0xff] %vm621, %v589
      %623 = vst.msk [vmem:[%s223 + $0x8] sm:$0xff] %vm621, %v590
      %624 = vst.msk [vmem:[%s223 + $0x10] sm:$0xff] %vm621, %v591
      %625 = vst.msk [vmem:[%s223 + $0x18] sm:$0xff] %vm621, %v592
      %626 = vst.msk [vmem:[%s223 + $0x20] sm:$0xff] %vm621, %v593
      %627 = vst.msk [vmem:[%s223 + $0x28] sm:$0xff] %vm621, %v594
      %628 = vst.msk [vmem:[%s223 + $0x30] sm:$0xff] %vm621, %v595
      %629 = vst.msk [vmem:[%s223 + $0x38] sm:$0xff] %vm621, %v596
      %630 = vst.msk [vmem:[%s223 + $0x40] sm:$0xff] %vm621, %v597
      %631 = vst.msk [vmem:[%s223 + $0x48] sm:$0xff] %vm621, %v598
      %632 = vst.msk [vmem:[%s223 + $0x50] sm:$0xff] %vm621, %v599
      %633 = vst.msk [vmem:[%s223 + $0x58] sm:$0xff] %vm621, %v600
      %634 = vst.msk [vmem:[%s223 + $0x60] sm:$0xff] %vm621, %v601
      %635 = vst.msk [vmem:[%s223 + $0x68] sm:$0xff] %vm621, %v602
      %636 = vst.msk [vmem:[%s223 + $0x70] sm:$0xff] %vm621, %v603
      %637 = vst.msk [vmem:[%s223 + $0x78] sm:$0xff] %vm621, %v604
      %638 = vst.msk [vmem:[%s223 + $0x80] sm:$0xff] %vm621, %v605
      %639 = vst.msk [vmem:[%s223 + $0x88] sm:$0xff] %vm621, %v606
      %640 = vst.msk [vmem:[%s223 + $0x90] sm:$0xff] %vm621, %v607
      %641 = vst.msk [vmem:[%s223 + $0x98] sm:$0xff] %vm621, %v608
      %642 = vst.msk [vmem:[%s223 + $0xa0] sm:$0xff] %vm621, %v609
      %643 = vst.msk [vmem:[%s223 + $0xa8] sm:$0xff] %vm621, %v610
      %644 = vst.msk [vmem:[%s223 + $0xb0] sm:$0xff] %vm621, %v611
      %645 = vst.msk [vmem:[%s223 + $0xb8] sm:$0xff] %vm621, %v612
      %646 = vst.msk [vmem:[%s223 + $0xc0] sm:$0xff] %vm621, %v613
      %647 = vst.msk [vmem:[%s223 + $0xc8] sm:$0xff] %vm621, %v614
      %648 = vst.msk [vmem:[%s223 + $0xd0] sm:$0xff] %vm621, %v615
      %649 = vst.msk [vmem:[%s223 + $0xd8] sm:$0xff] %vm621, %v616
      %650 = vst.msk [vmem:[%s223 + $0xe0] sm:$0xff] %vm621, %v617
      %651 = vst.msk [vmem:[%s223 + $0xe8] sm:$0xff] %vm621, %v618
      %652 = vst.msk [vmem:[%s223 + $0xf0] sm:$0xff] %vm621, %v619
      %653 = vst.msk [vmem:[%s223 + $0xf8] sm:$0xff] %vm621, %v620
      %s654 = smul.u32 32, %s18
      %p655 = scmp.lt.s32.totalorder %s654, 63
      %s656 = scalar_select %p655, %s654, 63
      %p657 = scmp.lt.s32.totalorder %s19, 0
      %s658 = scalar_select %p657, %s19, 0
      %s659 = sadd.s32 %s658, %s656
      %s660 = smul.addr %s659, 8
      %s661 = scalar_lea.vmem %s3, %s660
      // Predicated region
      $region33: #{tpu_custom_call.1} parent=31 // pred_check
        %p662 = pneg %p124
      $region34: #{tpu_custom_call.1} parent=31 // pred_check_branch
        %664 = sbr.rel (%p662) target = $region36
      $region35: #{tpu_custom_call.1} parent=31 // pred_region
        %s665 = smul.u32 32, %s18
      $region36: #{tpu_custom_call.1} parent=31 // pred_fallthru
        _
    $region32: #{tpu_custom_call.1} parent=5 // pred_fallthru
      _
    %p666 = scmp.le.s32.totalorder 2, %s9
    // Predicated region
    $region37: #{tpu_custom_call.1} parent=5 // pred_check
      %p667 = pneg %p666
    $region38: #{tpu_custom_call.1} parent=5 // pred_check_branch
      %669 = sbr.rel (%p667) target = $region40
    $region39: #{tpu_custom_call.1} parent=5 // pred_region
      %s670 = ssub.s32 %s9, 2
      // Predicated region
      $region41: #{tpu_custom_call.1} parent=39 // pred_check
        %p671 = pneg %p130
      $region42: #{tpu_custom_call.1} parent=39 // pred_check_branch
        %673 = sbr.rel (%p671) target = $region44
      $region43: #{tpu_custom_call.1} parent=39 // pred_region
        %s674 = smul.u32 32, %s20
        %p675 = scmp.lt.s32.totalorder %s674, 63
        %s676 = scalar_select %p675, %s674, 63
        %p677 = scmp.lt.s32.totalorder %s21, 0
        %s678 = scalar_select %p677, %s21, 0
        %s679 = sadd.s32 %s678, %s676
        %s680 = smul.addr %s679, 8
        %s681 = scalar_lea.vmem %s3, %s680
      $region44: #{tpu_custom_call.1} parent=39 // pred_fallthru
        _
    $region40: #{tpu_custom_call.1} parent=5 // pred_fallthru
      _
  $region6: #{tpu_custom_call.1} parent=0 // loop_footer
    %s13 = sadd.s32 1, %s9
  $region7: #{tpu_custom_call.1} parent=0 // loop_footer_branch
    %8 = sbr.rel target = $region3
  $region8: #{tpu_custom_call.1} parent=0 // loop_exit
    _

</llo_original>
